<compile_context>
chip_gen: v7x
topology: tpu7x:2x2x1
jax: 0.10.0
libtpu: 0.0.40
codegen_flags: <defaults>
</compile_context>

<pallas_src>
import functools

import jax
import jax.numpy as jnp
from jax import lax
from jax.experimental import pallas as pl
from jax.experimental.pallas import tpu as pltpu


def _kldiv_kernel(logits_ref, targets_ref, out_ref, acc_ref, *,
                  inv_T, N, tn, tiles_per_chunk):
    """Accumulate sum_rows sum_c p_ic * (log p_ic - log q_ic) for one chunk."""
    p_idx = pl.program_id(0)   # parallel chunk
    t_idx = pl.program_id(1)   # reduction step within the chunk

    @pl.when(t_idx == 0)
    def _():
        acc_ref[...] = jnp.zeros_like(acc_ref)

    x = logits_ref[...].astype(jnp.float32)   # (tn, C)
    y = targets_ref[...].astype(jnp.float32)  # (tn, C)
    if inv_T != 1.0:                          # static: skipped when T == 1.0
        x = x * jnp.float32(inv_T)
        y = y * jnp.float32(inv_T)

    # Shifted logits / log-sum-exp pieces along the class (lane) axis.
    x_shift = x - jnp.max(x, axis=-1, keepdims=True)
    y_shift = y - jnp.max(y, axis=-1, keepdims=True)
    sum_x = jnp.sum(jnp.exp(x_shift), axis=-1, keepdims=True)   # (tn, 1)
    ey = jnp.exp(y_shift)                                        # (tn, C)
    sum_y = jnp.sum(ey, axis=-1, keepdims=True)                  # (tn, 1)
    lse_x = jnp.log(sum_x)
    lse_y = jnp.log(sum_y)

    # sum_c p*(logp - logq) = sum_c ey*(y_shift - x_shift)/sum_y + lse_x - lse_y
    s = jnp.sum(ey * (y_shift - x_shift), axis=-1, keepdims=True)  # (tn, 1)
    kl_rows = s / sum_y + lse_x - lse_y                             # (tn, 1)

    # Mask rows past the true batch size (partial edge tile / clamped tiles).
    tile_idx = p_idx * tiles_per_chunk + t_idx
    row_ids = tile_idx * tn + lax.broadcasted_iota(jnp.int32, (tn, 1), 0)
    kl_rows = jnp.where(row_ids < N, kl_rows, jnp.float32(0.0))

    acc_ref[...] += kl_rows

    @pl.when(t_idx == pl.num_programs(1) - 1)
    def _():
        total = jnp.sum(acc_ref[...])
        out_ref[...] = jnp.full(out_ref.shape, total, dtype=jnp.float32)


def kldiv_pallas(logits, targets, T=1.0, reduction="batchmean"):
    assert reduction == "batchmean", "only batchmean is implemented"
    assert logits.shape == targets.shape and logits.ndim == 2
    N, C = logits.shape
    itemsize = jnp.dtype(logits.dtype).itemsize

    # ---- VMEM-budgeted row tile (keep full class axis per block) ----
    # Per row: 2 inputs x 2 pipeline buffers (input dtype) + ~5 f32 temporaries.
    bytes_per_row = C * (4 * itemsize + 5 * 4)
    target_bytes = 24 * 1024 * 1024
    if N <= 8:
        tn = N
    else:
        budget_rows = max(8, target_bytes // bytes_per_row)
        tn = min(1024, budget_rows, (N // 8) * 8)
        tn = max(8, (tn // 8) * 8)
    num_tiles = pl.cdiv(N, tn)

    # ---- split row tiles into independent chunks (megacore-friendly) ----
    P = 2 if num_tiles >= 2 else 1
    tiles_per_chunk = pl.cdiv(num_tiles, P)

    def in_index(p, t):
        # Clamp so the last (possibly empty) chunk step never DMAs out of bounds;
        # such steps are fully masked inside the kernel.
        tile = jnp.minimum(p * tiles_per_chunk + t, num_tiles - 1)
        return (tile, 0)

    kernel = functools.partial(
        _kldiv_kernel,
        inv_T=1.0 / float(T),
        N=N,
        tn=tn,
        tiles_per_chunk=tiles_per_chunk,
    )

    out = pl.pallas_call(
        kernel,
        out_shape=jax.ShapeDtypeStruct((P, 8, 128), jnp.float32),
        grid_spec=pltpu.PrefetchScalarGridSpec(
            num_scalar_prefetch=0,
            grid=(P, tiles_per_chunk),
            in_specs=[
                pl.BlockSpec((tn, C), in_index),
                pl.BlockSpec((tn, C), in_index),
            ],
            out_specs=pl.BlockSpec((1, 8, 128), lambda p, t: (p, 0, 0)),
            scratch_shapes=[pltpu.VMEM((tn, 1), jnp.float32)],
        ),
        compiler_params=pltpu.CompilerParams(
            dimension_semantics=("parallel", "arbitrary"),
            vmem_limit_bytes=48 * 1024 * 1024,
        ),
    )(logits, targets)

    partials = out[:, 0, 0]  # one partial KL sum per parallel chunk
    return partials.sum() / jnp.float32(N) * jnp.float32(T * T)


def kldiv_ref(logits, targets, T=1.0):
    q = jax.nn.log_softmax(logits.astype(jnp.float32) / T, axis=1)
    logp = jax.nn.log_softmax(targets.astype(jnp.float32) / T, axis=1)
    p = jnp.exp(logp)
    kl = jnp.sum(p * (logp - q)) / logits.shape[0]
    return kl * (T * T)


if __name__ == "__main__":
    key = jax.random.PRNGKey(0)
    k1, k2, k3, k4 = jax.random.split(key, 4)

    # Test 1: small, single tile, T = 1.0
    N, C = 8, 32
    logits = jax.random.normal(k1, (N, C), dtype=jnp.float32)
    targets = jax.random.normal(k2, (N, C), dtype=jnp.float32)
    out = jax.block_until_ready(kldiv_pallas(logits, targets, T=1.0))
    ref = kldiv_ref(logits, targets, T=1.0)
    assert jnp.allclose(out, ref, rtol=1e-5, atol=1e-5), (out, ref)

    # Test 2: ragged batch (masking + 2-chunk parallel path), T = 2.0
    N2, C2 = 20, 32
    logits2 = jax.random.normal(k3, (N2, C2), dtype=jnp.float32)
    targets2 = jax.random.normal(k4, (N2, C2), dtype=jnp.float32)
    out2 = jax.block_until_ready(kldiv_pallas(logits2, targets2, T=2.0))
    ref2 = kldiv_ref(logits2, targets2, T=2.0)
    assert jnp.allclose(out2, ref2, rtol=1e-5, atol=1e-5), (out2, ref2)

    print("KERNEL_OK")
</pallas_src>

<mosaic_0001>
module attributes {stable_mosaic.version = 11 : i64} {
  func.func @_kldiv_kernel(%arg0: i32, %arg1: i32, %arg2: memref<8x32xf32, #tpu.memory_space<vmem>>, %arg3: memref<8x32xf32, #tpu.memory_space<vmem>>, %arg4: memref<1x8x128xf32, #tpu.memory_space<vmem>>, %arg5: memref<8x1xf32, #tpu.memory_space<vmem>>) attributes {dimension_semantics = [#tpu.dimension_semantics<parallel>, #tpu.dimension_semantics<arbitrary>], iteration_bounds = array<i64: 1, 1>, scalar_prefetch = 0 : i64, scratch_operands = 1 : i64, tpu.core_type = #tpu.core_type<tc>, window_params = [{transform_indices = @transform_0, window_bounds = array<i64: 8, 32>}, {transform_indices = @transform_1, window_bounds = array<i64: 8, 32>}, {transform_indices = @transform_2, window_bounds = array<i64: 1, 8, 128>}]} {
    %c0_i32 = arith.constant 0 : i32
    %0 = arith.cmpi eq, %arg1, %c0_i32 : i32
    %1 = arith.extui %0 : i1 to i32
    %c0_i32_0 = arith.constant 0 : i32
    %2 = arith.cmpi ne, %1, %c0_i32_0 : i32
    scf.if %2 {
      %cst_16 = arith.constant 0.000000e+00 : f32
      %44 = vector.broadcast %cst_16 : f32 to vector<8x1xf32>
      %c0_17 = arith.constant 0 : index
      %c0_18 = arith.constant 0 : index
      %45 = vector.load %arg5[%c0_17, %c0_18] : memref<8x1xf32, #tpu.memory_space<vmem>>, vector<8x1xf32>
      tpu.vector_store %arg5[%c0_17, %c0_18], %44 {strides = array<i32>} : memref<8x1xf32, #tpu.memory_space<vmem>>, vector<8x1xf32>,
    } else {
    }
    %c0 = arith.constant 0 : index
    %c0_1 = arith.constant 0 : index
    %3 = vector.load %arg2[%c0, %c0_1] : memref<8x32xf32, #tpu.memory_space<vmem>>, vector<8x32xf32>
    %c0_2 = arith.constant 0 : index
    %c0_3 = arith.constant 0 : index
    %4 = vector.load %arg3[%c0_2, %c0_3] : memref<8x32xf32, #tpu.memory_space<vmem>>, vector<8x32xf32>
    %cst = arith.constant dense<0xFF800000> : vector<8xf32>
    %5 = vector.multi_reduction <maximumf>, %3, %cst [1] : vector<8x32xf32> to vector<8xf32>
    %6 = vector.shape_cast %5 : vector<8xf32> to vector<8x1xf32>
    %7 = vector.broadcast %6 : vector<8x1xf32> to vector<8x32xf32>
    %8 = arith.subf %3, %7 : vector<8x32xf32>
    %cst_4 = arith.constant dense<0xFF800000> : vector<8xf32>
    %9 = vector.multi_reduction <maximumf>, %4, %cst_4 [1] : vector<8x32xf32> to vector<8xf32>
    %10 = vector.shape_cast %9 : vector<8xf32> to vector<8x1xf32>
    %11 = vector.broadcast %10 : vector<8x1xf32> to vector<8x32xf32>
    %12 = arith.subf %4, %11 : vector<8x32xf32>
    %13 = math.exp %8 : vector<8x32xf32>
    %cst_5 = arith.constant dense<0.000000e+00> : vector<8xf32>
    %14 = vector.multi_reduction <add>, %13, %cst_5 [1] : vector<8x32xf32> to vector<8xf32>
    %15 = vector.shape_cast %14 : vector<8xf32> to vector<8x1xf32>
    %16 = math.exp %12 : vector<8x32xf32>
    %cst_6 = arith.constant dense<0.000000e+00> : vector<8xf32>
    %17 = vector.multi_reduction <add>, %16, %cst_6 [1] : vector<8x32xf32> to vector<8xf32>
    %18 = vector.shape_cast %17 : vector<8xf32> to vector<8x1xf32>
    %19 = math.log %15 : vector<8x1xf32>
    %20 = math.log %18 : vector<8x1xf32>
    %21 = arith.subf %12, %8 : vector<8x32xf32>
    %22 = arith.mulf %16, %21 : vector<8x32xf32>
    %cst_7 = arith.constant dense<0.000000e+00> : vector<8xf32>
    %23 = vector.multi_reduction <add>, %22, %cst_7 [1] : vector<8x32xf32> to vector<8xf32>
    %24 = vector.shape_cast %23 : vector<8xf32> to vector<8x1xf32>
    %25 = arith.divf %24, %18 : vector<8x1xf32>
    %26 = arith.addf %25, %19 : vector<8x1xf32>
    %27 = arith.subf %26, %20 : vector<8x1xf32>
    %c1_i32 = arith.constant 1 : i32
    %28 = arith.muli %arg0, %c1_i32 : i32
    %29 = arith.addi %28, %arg1 : i32
    %c8_i32 = arith.constant 8 : i32
    %30 = arith.muli %29, %c8_i32 : i32
    %31 = tpu.iota {dimensions = array<i32: 0>} : vector<8x1xi32>
    %32 = vector.broadcast %30 : i32 to vector<8x1xi32>
    %33 = arith.addi %32, %31 : vector<8x1xi32>
    %c8_i32_8 = arith.constant 8 : i32
    %34 = vector.broadcast %c8_i32_8 : i32 to vector<8x1xi32>
    %35 = arith.cmpi slt, %33, %34 : vector<8x1xi32>
    %cst_9 = arith.constant 0.000000e+00 : f32
    %36 = vector.broadcast %cst_9 : f32 to vector<8x1xf32>
    %37 = arith.select %35, %27, %36 : vector<8x1xi1>, vector<8x1xf32>
    %c0_10 = arith.constant 0 : index
    %c0_11 = arith.constant 0 : index
    %38 = vector.load %arg5[%c0_10, %c0_11] : memref<8x1xf32, #tpu.memory_space<vmem>>, vector<8x1xf32>
    %39 = arith.addf %38, %37 : vector<8x1xf32>
    %c0_12 = arith.constant 0 : index
    %c0_13 = arith.constant 0 : index
    %40 = vector.load %arg5[%c0_12, %c0_13] : memref<8x1xf32, #tpu.memory_space<vmem>>, vector<8x1xf32>
    tpu.vector_store %arg5[%c0_12, %c0_13], %39 {strides = array<i32>} : memref<8x1xf32, #tpu.memory_space<vmem>>, vector<8x1xf32>,
    %c0_i32_14 = arith.constant 0 : i32
    %41 = arith.cmpi eq, %arg1, %c0_i32_14 : i32
    %42 = arith.extui %41 : i1 to i32
    %c0_i32_15 = arith.constant 0 : i32
    %43 = arith.cmpi ne, %42, %c0_i32_15 : i32
    scf.if %43 {
      %c0_16 = arith.constant 0 : index
      %c0_17 = arith.constant 0 : index
      %44 = vector.load %arg5[%c0_16, %c0_17] : memref<8x1xf32, #tpu.memory_space<vmem>>, vector<8x1xf32>
      %45 = vector.shape_cast %44 : vector<8x1xf32> to vector<1x8x1xf32>
      %cst_18 = arith.constant dense<0.000000e+00> : vector<1xf32>
      %46 = vector.multi_reduction <add>, %45, %cst_18 [1, 2] : vector<1x8x1xf32> to vector<1xf32>
      %47 = vector.shape_cast %46 : vector<1xf32> to vector<1x1x1xf32>
      %48 = vector.extract %47[0, 0, 0] : f32 from vector<1x1x1xf32>
      %49 = vector.broadcast %48 : f32 to vector<1x8x128xf32>
      %c0_19 = arith.constant 0 : index
      %c0_20 = arith.constant 0 : index
      %c0_21 = arith.constant 0 : index
      %50 = vector.load %arg4[%c0_19, %c0_20, %c0_21] : memref<1x8x128xf32, #tpu.memory_space<vmem>>, vector<1x8x128xf32>
      tpu.vector_store %arg4[%c0_19, %c0_20, %c0_21], %49 {strides = array<i32>} : memref<1x8x128xf32, #tpu.memory_space<vmem>>, vector<1x8x128xf32>,
    } else {
    }
    return
  }
  func.func @transform_0(%arg0: i32, %arg1: i32) -> (i32, i32) {
    %c1_i32 = arith.constant 1 : i32
    %0 = arith.muli %arg0, %c1_i32 : i32
    %1 = arith.addi %0, %arg1 : i32
    %c0_i32 = arith.constant 0 : i32
    %2 = arith.minsi %1, %c0_i32 : i32
    %c0_i32_0 = arith.constant 0 : i32
    %c0_i32_1 = arith.constant 0 : i32
    return %2, %c0_i32_0 : i32, i32
  }
  func.func @transform_1(%arg0: i32, %arg1: i32) -> (i32, i32) {
    %c1_i32 = arith.constant 1 : i32
    %0 = arith.muli %arg0, %c1_i32 : i32
    %1 = arith.addi %0, %arg1 : i32
    %c0_i32 = arith.constant 0 : i32
    %2 = arith.minsi %1, %c0_i32 : i32
    %c0_i32_0 = arith.constant 0 : i32
    %c0_i32_1 = arith.constant 0 : i32
    return %2, %c0_i32_0 : i32, i32
  }
  func.func @transform_2(%arg0: i32, %arg1: i32) -> (i32, i32, i32) {
    %c0_i32 = arith.constant 0 : i32
    %c0_i32_0 = arith.constant 0 : i32
    %c0_i32_1 = arith.constant 0 : i32
    return %arg0, %c0_i32, %c0_i32_0 : i32, i32, i32
  }
}

</mosaic_0001>

<llo_original>
// kernel: tpu_custom_call.1
$region0: #{tpu_custom_call.1}
  #allocation0 [shape = 'u32[]', space=smem, size = 0x4, offset = 0x4, fixed_abs, tag = 'smem constant byte address 0x4 - core index']
  #allocation1 [shape = 'u32[144,128]{1,0:T(1,128)}', space=vmem, size = 0x12000, scoped, tag = 'internal scratch']
  #allocation2 [shape = 'f32[8,1]{1,0:T(8,128)}', space=vmem, size = 0x1000, scoped, tag = 'scratch operand']
  %s0 = inlined_call_operand.hbm [shape: f32[8,32], index: 0, kind: input, shape index: {}]
  %s1 = inlined_call_operand.hbm [shape: f32[8,32], index: 1, kind: input, shape index: {}]
  %s2 = inlined_call_operand.hbm [shape: f32[1,8,128], index: 2, kind: output, shape index: {}]
  %s3 = sld [smem:[#allocation0]]
  $region34: #{tpu_custom_call.1} parent=0
    _
  %s5 = ssub.s32 1, %s3
  %s6 = scalar_select 0, %s5, %s3
  $region1: #{tpu_custom_call.1} parent=0
    #allocation3 [shape = 'u8[4096]{0}', space=vmem, size = 0x1000, scoped, tag = 'input window, operand 0, single buffered']
    #allocation4 [shape = 's32[1]{0}', space=sflag, size = 0x4, scoped, tag = 'scoped memory for tpu_custom_call.1']
    #allocation5 [shape = 's32[1]{0}', space=sflag, size = 0x4, scoped, tag = 'scoped memory for tpu_custom_call.1']
    #allocation6 [shape = 'u8[4096]{0}', space=vmem, size = 0x1000, scoped, tag = 'input window, operand 1, single buffered']
    #allocation7 [shape = 's32[1]{0}', space=sflag, size = 0x4, scoped, tag = 'scoped memory for tpu_custom_call.1']
    #allocation8 [shape = 'u8[4096]{0}', space=vmem, size = 0x1000, scoped, tag = 'output window, operand 0, single buffered']
    %7 = vsyncpa [#allocation4], 0
    %8 = vsyncpa [#allocation7], 0
    %9 = vsyncpa [#allocation5], 0
    // Predicated region
    $region2: #{tpu_custom_call.1} parent=1 // pred_check
      _
    $region3: #{tpu_custom_call.1} parent=1 // pred_check_branch
      %11 = sbr.rel (0) target = $region5
    $region4: #{tpu_custom_call.1} parent=1 // pred_region
      %s12 = sadd.s32 0, 0
      %p13 = scmp.lt.s32.totalorder %s12, 0
      %s14 = scalar_select %p13, %s12, 0
      %s16 = ssub.s32 128, 128
      %17 = vsyncadd [#allocation4], %s16
      %s18 = smul.addr %s14, 128
      %s19 = scalar_lea.hbm %s0, %s18
      %s21 = sshll.u32 [#allocation3], 4
      %s22 = int_to_ptr.vmem [resolvable:$true] %s21
      %24 = dma.hbm_to_vmem [thread:$0]  %s19, 128, %s22, [#allocation4]
    $region5: #{tpu_custom_call.1} parent=1 // pred_fallthru
      _
    // Predicated region
    $region6: #{tpu_custom_call.1} parent=1 // pred_check
      _
    $region7: #{tpu_custom_call.1} parent=1 // pred_check_branch
      %26 = sbr.rel (0) target = $region9
    $region8: #{tpu_custom_call.1} parent=1 // pred_region
      %s27 = sadd.s32 0, 0
      %p28 = scmp.lt.s32.totalorder %s27, 0
      %s29 = scalar_select %p28, %s27, 0
      %s31 = ssub.s32 128, 128
      %32 = vsyncadd [#allocation7], %s31
      %s33 = smul.addr %s29, 128
      %s34 = scalar_lea.hbm %s1, %s33
      %s36 = sshll.u32 [#allocation6], 4
      %s37 = int_to_ptr.vmem [resolvable:$true] %s36
      %39 = dma.hbm_to_vmem [thread:$0]  %s34, 128, %s37, [#allocation7]
    $region9: #{tpu_custom_call.1} parent=1 // pred_fallthru
      _
    // Predicated region
    $region10: #{tpu_custom_call.1} parent=1 // pred_check
      _
    $region11: #{tpu_custom_call.1} parent=1 // pred_check_branch
      %41 = sbr.rel (0) target = $region13
    $region12: #{tpu_custom_call.1} parent=1 // pred_region
      %42 = dma.done [#allocation4], 128
    $region13: #{tpu_custom_call.1} parent=1 // pred_fallthru
      _
    // Predicated region
    $region14: #{tpu_custom_call.1} parent=1 // pred_check
      _
    $region15: #{tpu_custom_call.1} parent=1 // pred_check_branch
      %44 = sbr.rel (0) target = $region17
    $region16: #{tpu_custom_call.1} parent=1 // pred_region
      %45 = dma.done [#allocation7], 128
    $region17: #{tpu_custom_call.1} parent=1 // pred_fallthru
      _
    %s46 = sadd.s32 0, 0
    %p47 = scmp.lt.s32.totalorder %s46, 0
    %s48 = scalar_select %p47, %s46, 0
    %s49 = sadd.s32 0, 0
    %p50 = scmp.lt.s32.totalorder %s49, 0
    %s51 = scalar_select %p50, %s49, 0
    %p52 = scmp.eq.s32.totalorder 0, 0
    // Predicated region
    $region18: #{tpu_custom_call.1} parent=1 // pred_check
      %p53 = pneg %p52
    $region19: #{tpu_custom_call.1} parent=1 // pred_check_branch
      %55 = sbr.rel (%p53) target = $region21
    $region20: #{tpu_custom_call.1} parent=1 // pred_region
      %vm56 = vcmask 7168
      %57 = vst.msk [vmem:[#allocation2] sm:$0xff] %vm56, 0.0
    $region21: #{tpu_custom_call.1} parent=1 // pred_fallthru
      _
    %v58 = vld [vmem:[#allocation3] sm:$0xff]
    %v59 = vld [vmem:[#allocation6] sm:$0xff]
    %vm60 = vcmask 261120
    %v61 = vsel %vm60, %v58, -inf
    %62 = vmax.xlane.f32.xlu0 %v61
    %v63 = vpop.xlane.xlu0 %62
    %v64 = vsub.f32 %v58, %v63
    %v65 = vsel %vm60, %v59, -inf
    %66 = vmax.xlane.f32.xlu0 %v65
    %v67 = vpop.xlane.xlu0 %66
    %v68 = vsub.f32 %v59, %v67
    %v69 = vmul.f32 %v64, 1.442695
    %v70 = vpow.pop %v69
    %v71 = vsel %vm60, %v70, 0.0
    %72 = vadd.xlane.f32.xlu0 %v71
    %v73 = vpop.xlane.xlu0 %72
    %v74 = vmul.f32 %v68, 1.442695
    %v75 = vpow.pop %v74
    %v76 = vsel %vm60, %v75, 0.0
    %77 = vadd.xlane.f32.xlu0 %v76
    %v78 = vpop.xlane.xlu0 %77
    %v79 = vlog2.pop %v73
    %v80 = vmul.f32 %v79, 0.6931472
    %v81 = vlog2.pop %v78
    %v82 = vmul.f32 %v81, 0.6931472
    %v83 = vsub.f32 %v68, %v64
    %v84 = vmul.f32 %v75, %v83
    %v85 = vsel %vm60, %v84, 0.0
    %86 = vadd.xlane.f32.xlu0 %v85
    %v87 = vpop.xlane.xlu0 %86
    %v88 = vrcp.pop %v78
    %v89 = vmul.f32 %v87, %v88
    %v90 = vadd.f32 %v89, %v80
    %v91 = vsub.f32 %v90, %v82
    %s92 = sadd.s32 0, 0
    %s93 = smul.u32 %s92, 8
    %v94 = vlaneseq
    %v95 = vshrl.u32 %v94, 7
    %v96 = vstv %s93
    %v97 = vadd.s32 %v96, %v95
    %vm98 = vcmp.lt.s32.totalorder %v97, 8
    %v99 = vsel %vm98, %v91, 0.0
    %v100 = vld [vmem:[#allocation2] sm:$0xff]
    %v101 = vadd.f32 %v100, %v99
    %vm102 = vcmask 7168
    %103 = vst.msk [vmem:[#allocation2] sm:$0xff] %vm102, %v101
    // Predicated region
    $region22: #{tpu_custom_call.1} parent=1 // pred_check
      %p104 = pneg %p52
    $region23: #{tpu_custom_call.1} parent=1 // pred_check_branch
      %106 = sbr.rel (%p104) target = $region25
    $region24: #{tpu_custom_call.1} parent=1 // pred_region
      %v107 = vld [vmem:[#allocation2] sm:$0xff]
      %v108 = vsel %vm102, %v107, 0.0
      %109 = vadd.xlane.f32.xlu0 %v108
      %v110 = vpop.xlane.xlu0 %109
      %v111 = vrot.slane %v110, 4
      %v112 = vadd.f32 %v110, %v111
      %v113 = vrot.slane %v112, 2
      %v114 = vadd.f32 %v112, %v113
      %v115 = vrot.slane %v114, 1
      %v116 = vadd.f32 %v114, %v115
      %s117 = vtos %v116
      %v118 = vstv %s117
      %119 = vst [vmem:[#allocation8] sm:$0xff] %v118
    $region25: #{tpu_custom_call.1} parent=1 // pred_fallthru
      _
    // Predicated region
    $region26: #{tpu_custom_call.1} parent=1 // pred_check
      _
    $region27: #{tpu_custom_call.1} parent=1 // pred_check_branch
      %121 = sbr.rel (0) target = $region29
    $region28: #{tpu_custom_call.1} parent=1 // pred_region
      %s123 = ssub.s32 128, 128
      %124 = vsyncadd [#allocation5], %s123
      %s126 = sshll.u32 [#allocation8], 4
      %s127 = int_to_ptr.vmem [resolvable:$true] %s126
      %129 = dma.vmem_to_hbm [thread:$0]  %s127, 128, %s2, [#allocation5]
    $region29: #{tpu_custom_call.1} parent=1 // pred_fallthru
      _
    // Predicated region
    $region30: #{tpu_custom_call.1} parent=1 // pred_check
      _
    $region31: #{tpu_custom_call.1} parent=1 // pred_check_branch
      %131 = sbr.rel (0) target = $region33
    $region32: #{tpu_custom_call.1} parent=1 // pred_region
      %132 = dma.done [#allocation5], 128
    $region33: #{tpu_custom_call.1} parent=1 // pred_fallthru
      _
    %133 = vsyncpa [#allocation4], 1
    %134 = vsyncpa [#allocation7], 1
    %135 = vsyncpa [#allocation5], 1

</llo_original>
